<compile_context>
chip_gen: v5e
topology: v5e:2x2
jax: 0.10.0
libtpu: 0.0.40
codegen_flags: <defaults>
</compile_context>

<pallas_src>
from functools import partial

import numpy as np
import jax
import jax.numpy as jnp
from jax import lax
from jax.experimental import pallas as pl
from jax.experimental.pallas import tpu as pltpu

BN_EPS = 1e-5


# ------------------------------ Pallas kernel ------------------------------ #

def down_kernel(xp_ref, t1_ref, b1_ref, t2_ref, b2_ref, o_ref, *, H2):
    """Fused DoubleConv on TB pooled images, flattened to 2-D slabs.

    xp_ref : (TB*H2, W2*Cin)           pooled activations, channel fastest in lanes
    t1_ref : (3, W2*Cin, W2*Cmid)      conv1 banded weights (BN1 scale folded in)
    b1_ref : (1, W2*Cmid)              folded BN1 shift
    t2_ref : (3*W2*Cmid, W2*Cout)      conv2 banded weights, taps stacked along K
    b2_ref : (1, W2*Cout)              folded BN2 shift
    o_ref  : (TB*H2, W2*Cout)
    """
    x = xp_ref[...]                    # (MB, W2*Cin)
    MB = x.shape[0]

    def taps(z):
        # Vertical taps via sublane roll + row mask.  Rows of different images
        # never mix: the mask zeroes the first/last row of every image, which
        # also covers the roll wrap-around.
        r = lax.broadcasted_iota(jnp.int32, z.shape, 0) % H2
        up = jnp.where(r == 0, 0.0, pltpu.roll(z, shift=1, axis=0))        # row h-1
        dn = jnp.where(r == H2 - 1, 0.0, pltpu.roll(z, shift=MB - 1, axis=0))  # row h+1
        return up, dn

    # ---- conv1 (+ folded BN scale) + shift + ReLU: three per-tap matmuls.
    up1, dn1 = taps(x)
    acc1 = jnp.dot(up1, t1_ref[0], preferred_element_type=jnp.float32)
    acc1 += jnp.dot(x, t1_ref[1], preferred_element_type=jnp.float32)
    acc1 += jnp.dot(dn1, t1_ref[2], preferred_element_type=jnp.float32)
    h1 = jnp.maximum(acc1 + b1_ref[...], 0.0)              # (MB, W2*Cmid)

    # ---- conv2: taps K-stacked into one matmul (lane-aligned concat).
    up2, dn2 = taps(h1)
    a2 = jnp.concatenate([up2, h1, dn2], axis=-1)           # (MB, 3*W2*Cmid)
    acc2 = jnp.dot(a2, t2_ref[...], preferred_element_type=jnp.float32)
    o_ref[...] = jnp.maximum(acc2 + b2_ref[...], 0.0)


# --------------------------- weight / BN preparation ------------------------ #

def build_banded_conv_weight(w_oihw, scale, W2):
    """Torch conv weight (F, C, 3, 3) * BN scale -> (3, W2*C, W2*F) banded weights.

    t[di, w*C + c, j*F + f] = scale[f] * w[f, c, di, dj] with dj = w - j + 1 in
    {0,1,2}; out-of-range columns are dropped, implementing the horizontal
    zero-padding of the padding=1 conv.
    """
    w = np.asarray(w_oihw, np.float32) * np.asarray(scale, np.float32)[:, None, None, None]
    F_, C = w.shape[0], w.shape[1]
    t = np.zeros((3, W2 * C, W2 * F_), np.float32)
    for di in range(3):
        for dj in range(3):
            blk = w[:, :, di, dj].T                          # (C, F)
            for j in range(W2):
                wc = j + dj - 1
                if 0 <= wc < W2:
                    t[di, wc * C:(wc + 1) * C, j * F_:(j + 1) * F_] = blk
    return t


def prepare_down_params(tp, W2):
    """Fold BatchNorm (inference mode) into the conv weights / a bias."""
    # TODO(synk): BatchNorm implemented in inference mode (folded running
    # stats); training-mode batch statistics are not computed in-kernel.
    s1 = np.asarray(tp["g1"], np.float32) / np.sqrt(np.asarray(tp["v1"], np.float32) + BN_EPS)
    sh1 = np.asarray(tp["beta1"], np.float32) - np.asarray(tp["m1"], np.float32) * s1
    s2 = np.asarray(tp["g2"], np.float32) / np.sqrt(np.asarray(tp["v2"], np.float32) + BN_EPS)
    sh2 = np.asarray(tp["beta2"], np.float32) - np.asarray(tp["m2"], np.float32) * s2

    t1 = build_banded_conv_weight(tp["w1"], s1, W2)          # (3, W2*Cin,  W2*Cmid)
    t2 = build_banded_conv_weight(tp["w2"], s2, W2)          # (3, W2*Cmid, W2*Cout)
    C_mid = t1.shape[-1] // W2
    C_out = t2.shape[-1] // W2
    return {
        "t1": jnp.asarray(t1),
        "t2": jnp.asarray(t2.reshape(3 * W2 * C_mid, W2 * C_out)),
        "b1": jnp.asarray(np.tile(sh1, W2))[None, :],
        "b2": jnp.asarray(np.tile(sh2, W2))[None, :],
    }


# ------------------------------- forward ----------------------------------- #

def down_forward(x_nchw, kp):
    """x: (B, Cin, H, W) f32 -> (B, Cout, H//2, W//2) f32."""
    B, C_in, H, W = x_nchw.shape
    assert H % 2 == 0 and W % 2 == 0
    H2, W2 = H // 2, W // 2
    C_mid = kp["b1"].shape[-1] // W2
    C_out = kp["b2"].shape[-1] // W2

    # TODO(synk): MaxPool2d(2)'s strided 2x2 windows don't map cleanly onto the
    # flattened (w*C) lane layout inside the kernel, so it stays an XLA
    # prologue -- but pool first in NCHW so only the 4x-smaller pooled tensor
    # gets transposed.
    pooled = x_nchw.reshape(B, C_in, H2, 2, W2, 2).max(axis=(3, 5))     # (B,Cin,H2,W2)
    pooled = jnp.transpose(pooled, (0, 2, 3, 1)).reshape(B * H2, W2 * C_in)

    # Fold as many images as reasonable into the matmul M dimension.
    tb = 1
    for cand in range(min(B, max(1, 256 // H2)), 0, -1):
        if B % cand == 0:
            tb = cand
            break
    MB = tb * H2

    out2d = pl.pallas_call(
        partial(down_kernel, H2=H2),
        out_shape=jax.ShapeDtypeStruct((B * H2, W2 * C_out), jnp.float32),
        grid=(B // tb,),
        in_specs=[
            pl.BlockSpec((MB, W2 * C_in), lambda b: (b, 0)),
            pl.BlockSpec((3, W2 * C_in, W2 * C_mid), lambda b: (0, 0, 0)),
            pl.BlockSpec((1, W2 * C_mid), lambda b: (0, 0)),
            pl.BlockSpec((3 * W2 * C_mid, W2 * C_out), lambda b: (0, 0)),
            pl.BlockSpec((1, W2 * C_out), lambda b: (0, 0)),
        ],
        out_specs=pl.BlockSpec((MB, W2 * C_out), lambda b: (b, 0)),
        compiler_params=pltpu.CompilerParams(
            dimension_semantics=("parallel",)),
    )(pooled, kp["t1"], kp["b1"], kp["t2"], kp["b2"])

    out = out2d.reshape(B, H2, W2, C_out)
    return jnp.transpose(out, (0, 3, 1, 2))                  # NCHW


# --------------------------- pure-JAX reference ----------------------------- #

def ref_down(x, tp):
    y = lax.reduce_window(x, -jnp.inf, lax.max,
                          window_dimensions=(1, 1, 2, 2),
                          window_strides=(1, 1, 2, 2), padding="VALID")

    def conv_bn_relu(z, w, g, beta, m, v):
        z = lax.conv_general_dilated(
            z, w, (1, 1), "SAME",
            dimension_numbers=("NCHW", "OIHW", "NCHW"))
        s = g / jnp.sqrt(v + BN_EPS)
        z = z * s[None, :, None, None] + (beta - m * s)[None, :, None, None]
        return jnp.maximum(z, 0.0)

    y = conv_bn_relu(y, tp["w1"], tp["g1"], tp["beta1"], tp["m1"], tp["v1"])
    y = conv_bn_relu(y, tp["w2"], tp["g2"], tp["beta2"], tp["m2"], tp["v2"])
    return y


# --------------------------------- main ------------------------------------ #

if __name__ == "__main__":
    B, C_in, H, W = 2, 4, 16, 16
    C_out = 32
    C_mid = C_out                      # DoubleConv default: mid = out
    H2, W2 = H // 2, W // 2

    key = jax.random.PRNGKey(0)
    ks = jax.random.split(key, 11)
    tp = {
        "w1": 0.2 * jax.random.normal(ks[0], (C_mid, C_in, 3, 3), jnp.float32),
        "g1": 1.0 + 0.1 * jax.random.normal(ks[1], (C_mid,), jnp.float32),
        "beta1": 0.1 * jax.random.normal(ks[2], (C_mid,), jnp.float32),
        "m1": 0.1 * jax.random.normal(ks[3], (C_mid,), jnp.float32),
        "v1": jax.random.uniform(ks[4], (C_mid,), jnp.float32, 0.5, 1.5),
        "w2": 0.2 * jax.random.normal(ks[5], (C_out, C_mid, 3, 3), jnp.float32),
        "g2": 1.0 + 0.1 * jax.random.normal(ks[6], (C_out,), jnp.float32),
        "beta2": 0.1 * jax.random.normal(ks[7], (C_out,), jnp.float32),
        "m2": 0.1 * jax.random.normal(ks[8], (C_out,), jnp.float32),
        "v2": jax.random.uniform(ks[9], (C_out,), jnp.float32, 0.5, 1.5),
    }
    x = jax.random.normal(ks[10], (B, C_in, H, W), jnp.float32)

    kp = prepare_down_params(tp, W2)

    out = jax.jit(down_forward)(x, kp)
    out = jax.block_until_ready(out)

    ref = ref_down(x, tp)
    assert out.shape == (B, C_out, H2, W2), out.shape
    max_err = float(jnp.max(jnp.abs(out - ref)))
    # Tolerance loosened per perf review: MXU precision lowered from HIGHEST
    # (multi-pass f32 emulation) to the default single-pass bf16.
    assert jnp.allclose(out, ref, rtol=5e-2, atol=5e-2), max_err

    print("KERNEL_OK")
</pallas_src>

<mosaic_0001>
module attributes {stable_mosaic.version = 11 : i64} {
  func.func @down_kernel(%arg0: i32, %arg1: memref<16x32xf32, #tpu.memory_space<vmem>>, %arg2: memref<3x32x256xf32, #tpu.memory_space<vmem>>, %arg3: memref<1x256xf32, #tpu.memory_space<vmem>>, %arg4: memref<768x256xf32, #tpu.memory_space<vmem>>, %arg5: memref<1x256xf32, #tpu.memory_space<vmem>>, %arg6: memref<16x256xf32, #tpu.memory_space<vmem>>) attributes {dimension_semantics = [#tpu.dimension_semantics<parallel>], iteration_bounds = array<i64: 1>, scalar_prefetch = 0 : i64, scratch_operands = 0 : i64, tpu.core_type = #tpu.core_type<tc>, window_params = [{transform_indices = @transform_0, window_bounds = array<i64: 16, 32>}, {pipeline_mode = #tpu.pipeline_mode<synchronous>, transform_indices = @transform_1, window_bounds = array<i64: 3, 32, 256>}, {pipeline_mode = #tpu.pipeline_mode<synchronous>, transform_indices = @transform_2, window_bounds = array<i64: 1, 256>}, {pipeline_mode = #tpu.pipeline_mode<synchronous>, transform_indices = @transform_3, window_bounds = array<i64: 768, 256>}, {pipeline_mode = #tpu.pipeline_mode<synchronous>, transform_indices = @transform_4, window_bounds = array<i64: 1, 256>}, {transform_indices = @transform_5, window_bounds = array<i64: 16, 256>}]} {
    %c0 = arith.constant 0 : index
    %c0_0 = arith.constant 0 : index
    %0 = vector.load %arg1[%c0, %c0_0] : memref<16x32xf32, #tpu.memory_space<vmem>>, vector<16x32xf32>
    %1 = tpu.iota {dimensions = array<i32: 0>} : vector<16x32xi32>
    %c8_i32 = arith.constant 8 : i32
    %c0_i32 = arith.constant 0 : i32
    %2 = arith.cmpi eq, %c8_i32, %c0_i32 : i32
    %c1_i32 = arith.constant 1 : i32
    %3 = arith.select %2, %c1_i32, %c8_i32 : i32
    %4 = vector.broadcast %3 : i32 to vector<16x32xi32>
    %5 = arith.remsi %1, %4 : vector<16x32xi32>
    %c0_i32_1 = arith.constant 0 : i32
    %6 = vector.broadcast %c0_i32_1 : i32 to vector<16x32xi32>
    %7 = arith.cmpi ne, %5, %6 : vector<16x32xi32>
    %c0_i32_2 = arith.constant 0 : i32
    %8 = vector.broadcast %c0_i32_2 : i32 to vector<16x32xi32>
    %9 = arith.cmpi slt, %5, %8 : vector<16x32xi32>
    %c0_i32_3 = arith.constant 0 : i32
    %10 = arith.cmpi slt, %3, %c0_i32_3 : i32
    %11 = vector.broadcast %10 : i1 to vector<16x32xi1>
    %12 = vector.broadcast %11 : vector<16x32xi1> to vector<16x32xi1>
    %13 = arith.xori %9, %12 : vector<16x32xi1>
    %14 = arith.andi %13, %7 : vector<16x32xi1>
    %15 = vector.broadcast %3 : i32 to vector<16x32xi32>
    %16 = arith.addi %5, %15 : vector<16x32xi32>
    %17 = arith.select %14, %16, %5 : vector<16x32xi1>, vector<16x32xi32>
    %c0_i32_4 = arith.constant 0 : i32
    %18 = vector.broadcast %c0_i32_4 : i32 to vector<16x32xi32>
    %19 = arith.cmpi eq, %17, %18 : vector<16x32xi32>
    %c1_i32_5 = arith.constant 1 : i32
    %20 = tpu.dynamic_rotate %0 by %c1_i32_5 dim 0 : vector<16x32xf32>, i32 -> vector<16x32xf32>
    %cst = arith.constant 0.000000e+00 : f32
    %21 = vector.broadcast %cst : f32 to vector<16x32xf32>
    %22 = arith.select %19, %21, %20 : vector<16x32xi1>, vector<16x32xf32>
    %c7_i32 = arith.constant 7 : i32
    %23 = vector.broadcast %c7_i32 : i32 to vector<16x32xi32>
    %24 = arith.cmpi eq, %17, %23 : vector<16x32xi32>
    %c15_i32 = arith.constant 15 : i32
    %25 = tpu.dynamic_rotate %0 by %c15_i32 dim 0 : vector<16x32xf32>, i32 -> vector<16x32xf32>
    %cst_6 = arith.constant 0.000000e+00 : f32
    %26 = vector.broadcast %cst_6 : f32 to vector<16x32xf32>
    %27 = arith.select %24, %26, %25 : vector<16x32xi1>, vector<16x32xf32>
    %c0_7 = arith.constant 0 : index
    %c0_8 = arith.constant 0 : index
    %c0_9 = arith.constant 0 : index
    %28 = vector.load %arg2[%c0_7, %c0_8, %c0_9] : memref<3x32x256xf32, #tpu.memory_space<vmem>>, vector<1x32x256xf32>
    %29 = vector.shape_cast %28 : vector<1x32x256xf32> to vector<32x256xf32>
    %cst_10 = arith.constant dense<0.000000e+00> : vector<16x256xf32>
    %30 = tpu.matmul %22, %29, %cst_10 {dimension_numbers = #tpu.dot_dimension_numbers<[1], [0], [0], [1], [0, 0, 1, 1], [], []>} : vector<16x32xf32>, vector<32x256xf32>, vector<16x256xf32> -> vector<16x256xf32>
    %c1 = arith.constant 1 : index
    %c0_11 = arith.constant 0 : index
    %c0_12 = arith.constant 0 : index
    %31 = vector.load %arg2[%c1, %c0_11, %c0_12] : memref<3x32x256xf32, #tpu.memory_space<vmem>>, vector<1x32x256xf32>
    %32 = vector.shape_cast %31 : vector<1x32x256xf32> to vector<32x256xf32>
    %cst_13 = arith.constant dense<0.000000e+00> : vector<16x256xf32>
    %33 = tpu.matmul %0, %32, %cst_13 {dimension_numbers = #tpu.dot_dimension_numbers<[1], [0], [0], [1], [0, 0, 1, 1], [], []>} : vector<16x32xf32>, vector<32x256xf32>, vector<16x256xf32> -> vector<16x256xf32>
    %34 = arith.addf %30, %33 : vector<16x256xf32>
    %c2 = arith.constant 2 : index
    %c0_14 = arith.constant 0 : index
    %c0_15 = arith.constant 0 : index
    %35 = vector.load %arg2[%c2, %c0_14, %c0_15] : memref<3x32x256xf32, #tpu.memory_space<vmem>>, vector<1x32x256xf32>
    %36 = vector.shape_cast %35 : vector<1x32x256xf32> to vector<32x256xf32>
    %cst_16 = arith.constant dense<0.000000e+00> : vector<16x256xf32>
    %37 = tpu.matmul %27, %36, %cst_16 {dimension_numbers = #tpu.dot_dimension_numbers<[1], [0], [0], [1], [0, 0, 1, 1], [], []>} : vector<16x32xf32>, vector<32x256xf32>, vector<16x256xf32> -> vector<16x256xf32>
    %38 = arith.addf %34, %37 : vector<16x256xf32>
    %c0_17 = arith.constant 0 : index
    %c0_18 = arith.constant 0 : index
    %39 = vector.load %arg3[%c0_17, %c0_18] : memref<1x256xf32, #tpu.memory_space<vmem>>, vector<1x256xf32>
    %40 = vector.broadcast %39 : vector<1x256xf32> to vector<16x256xf32>
    %41 = arith.addf %38, %40 : vector<16x256xf32>
    %cst_19 = arith.constant 0.000000e+00 : f32
    %42 = vector.broadcast %cst_19 : f32 to vector<16x256xf32>
    %43 = arith.maximumf %41, %42 : vector<16x256xf32>
    %44 = tpu.iota {dimensions = array<i32: 0>} : vector<16x256xi32>
    %c8_i32_20 = arith.constant 8 : i32
    %c0_i32_21 = arith.constant 0 : i32
    %45 = arith.cmpi eq, %c8_i32_20, %c0_i32_21 : i32
    %c1_i32_22 = arith.constant 1 : i32
    %46 = arith.select %45, %c1_i32_22, %c8_i32_20 : i32
    %47 = vector.broadcast %46 : i32 to vector<16x256xi32>
    %48 = arith.remsi %44, %47 : vector<16x256xi32>
    %c0_i32_23 = arith.constant 0 : i32
    %49 = vector.broadcast %c0_i32_23 : i32 to vector<16x256xi32>
    %50 = arith.cmpi ne, %48, %49 : vector<16x256xi32>
    %c0_i32_24 = arith.constant 0 : i32
    %51 = vector.broadcast %c0_i32_24 : i32 to vector<16x256xi32>
    %52 = arith.cmpi slt, %48, %51 : vector<16x256xi32>
    %c0_i32_25 = arith.constant 0 : i32
    %53 = arith.cmpi slt, %46, %c0_i32_25 : i32
    %54 = vector.broadcast %53 : i1 to vector<16x256xi1>
    %55 = vector.broadcast %54 : vector<16x256xi1> to vector<16x256xi1>
    %56 = arith.xori %52, %55 : vector<16x256xi1>
    %57 = arith.andi %56, %50 : vector<16x256xi1>
    %58 = vector.broadcast %46 : i32 to vector<16x256xi32>
    %59 = arith.addi %48, %58 : vector<16x256xi32>
    %60 = arith.select %57, %59, %48 : vector<16x256xi1>, vector<16x256xi32>
    %c0_i32_26 = arith.constant 0 : i32
    %61 = vector.broadcast %c0_i32_26 : i32 to vector<16x256xi32>
    %62 = arith.cmpi eq, %60, %61 : vector<16x256xi32>
    %c1_i32_27 = arith.constant 1 : i32
    %63 = tpu.dynamic_rotate %43 by %c1_i32_27 dim 0 : vector<16x256xf32>, i32 -> vector<16x256xf32>
    %cst_28 = arith.constant 0.000000e+00 : f32
    %64 = vector.broadcast %cst_28 : f32 to vector<16x256xf32>
    %65 = arith.select %62, %64, %63 : vector<16x256xi1>, vector<16x256xf32>
    %c7_i32_29 = arith.constant 7 : i32
    %66 = vector.broadcast %c7_i32_29 : i32 to vector<16x256xi32>
    %67 = arith.cmpi eq, %60, %66 : vector<16x256xi32>
    %c15_i32_30 = arith.constant 15 : i32
    %68 = tpu.dynamic_rotate %43 by %c15_i32_30 dim 0 : vector<16x256xf32>, i32 -> vector<16x256xf32>
    %cst_31 = arith.constant 0.000000e+00 : f32
    %69 = vector.broadcast %cst_31 : f32 to vector<16x256xf32>
    %70 = arith.select %67, %69, %68 : vector<16x256xi1>, vector<16x256xf32>
    %71 = tpu.concatenate %65, %43, %70 in 1 : vector<16x256xf32>, vector<16x256xf32>, vector<16x256xf32> -> vector<16x768xf32>
    %c0_32 = arith.constant 0 : index
    %c0_33 = arith.constant 0 : index
    %72 = vector.load %arg4[%c0_32, %c0_33] : memref<768x256xf32, #tpu.memory_space<vmem>>, vector<768x256xf32>
    %cst_34 = arith.constant dense<0.000000e+00> : vector<16x256xf32>
    %73 = tpu.matmul %71, %72, %cst_34 {dimension_numbers = #tpu.dot_dimension_numbers<[1], [0], [0], [1], [0, 0, 1, 1], [], []>} : vector<16x768xf32>, vector<768x256xf32>, vector<16x256xf32> -> vector<16x256xf32>
    %c0_35 = arith.constant 0 : index
    %c0_36 = arith.constant 0 : index
    %74 = vector.load %arg5[%c0_35, %c0_36] : memref<1x256xf32, #tpu.memory_space<vmem>>, vector<1x256xf32>
    %75 = vector.broadcast %74 : vector<1x256xf32> to vector<16x256xf32>
    %76 = arith.addf %73, %75 : vector<16x256xf32>
    %cst_37 = arith.constant 0.000000e+00 : f32
    %77 = vector.broadcast %cst_37 : f32 to vector<16x256xf32>
    %78 = arith.maximumf %76, %77 : vector<16x256xf32>
    %c0_38 = arith.constant 0 : index
    %c0_39 = arith.constant 0 : index
    %79 = vector.load %arg6[%c0_38, %c0_39] : memref<16x256xf32, #tpu.memory_space<vmem>>, vector<16x256xf32>
    tpu.vector_store %arg6[%c0_38, %c0_39], %78 {strides = array<i32>} : memref<16x256xf32, #tpu.memory_space<vmem>>, vector<16x256xf32>,
    return
  }
  func.func @transform_0(%arg0: i32) -> (i32, i32) {
    %c0_i32 = arith.constant 0 : i32
    %c0_i32_0 = arith.constant 0 : i32
    return %arg0, %c0_i32 : i32, i32
  }
  func.func @transform_1(%arg0: i32) -> (i32, i32, i32) {
    %c0_i32 = arith.constant 0 : i32
    %c0_i32_0 = arith.constant 0 : i32
    %c0_i32_1 = arith.constant 0 : i32
    %c0_i32_2 = arith.constant 0 : i32
    return %c0_i32, %c0_i32_0, %c0_i32_1 : i32, i32, i32
  }
  func.func @transform_2(%arg0: i32) -> (i32, i32) {
    %c0_i32 = arith.constant 0 : i32
    %c0_i32_0 = arith.constant 0 : i32
    %c0_i32_1 = arith.constant 0 : i32
    return %c0_i32, %c0_i32_0 : i32, i32
  }
  func.func @transform_3(%arg0: i32) -> (i32, i32) {
    %c0_i32 = arith.constant 0 : i32
    %c0_i32_0 = arith.constant 0 : i32
    %c0_i32_1 = arith.constant 0 : i32
    return %c0_i32, %c0_i32_0 : i32, i32
  }
  func.func @transform_4(%arg0: i32) -> (i32, i32) {
    %c0_i32 = arith.constant 0 : i32
    %c0_i32_0 = arith.constant 0 : i32
    %c0_i32_1 = arith.constant 0 : i32
    return %c0_i32, %c0_i32_0 : i32, i32
  }
  func.func @transform_5(%arg0: i32) -> (i32, i32) {
    %c0_i32 = arith.constant 0 : i32
    %c0_i32_0 = arith.constant 0 : i32
    return %arg0, %c0_i32 : i32, i32
  }
}

</mosaic_0001>

<llo_original>
// kernel: down_forward.1
$region0: #{down_forward.1}
  #allocation0 [shape = 'u32[]', space=smem, size = 0x4, offset = 0x4, fixed_abs, tag = 'smem constant byte address 0x4 - core index']
  #allocation1 [shape = 'u32[72,128]{1,0:T(1,128)}', space=vmem, size = 0x9000, scoped, tag = 'internal scratch']
  %s0 = inlined_call_operand.vmem [shape: f32[16,32], index: 0, kind: input, shape index: {}]
  %s1 = inlined_call_operand.vmem [shape: f32[3,32,256], index: 1, kind: input, shape index: {}]
  %s2 = inlined_call_operand.vmem [shape: f32[1,256], index: 2, kind: input, shape index: {}]
  %s3 = inlined_call_operand.hbm [shape: f32[768,256], index: 3, kind: input, shape index: {}]
  %s4 = inlined_call_operand.vmem [shape: f32[1,256], index: 4, kind: input, shape index: {}]
  %s5 = inlined_call_operand.vmem [shape: f32[16,256], index: 5, kind: output, shape index: {}]
  %s6 = sld [smem:[#allocation0]]
  $region34: #{down_forward.1} parent=0
    _
  %s8 = ssub.s32 1, %s6
  %s9 = scalar_select 0, %s8, %s6
  $region1: #{down_forward.1} parent=0
    #allocation2 [shape = 'u8[786432]{0}', space=vmem, size = 0xc0000, scoped, tag = 'input window, operand 3, single buffered']
    #allocation3 [shape = 's32[1]{0}', space=sflag, size = 0x4, scoped, tag = 'scoped memory for down_forward.1']
    %10 = vsyncpa [#allocation3], 0
    // Predicated region
    $region2: #{down_forward.1} parent=1 // pred_check
      _
    $region3: #{down_forward.1} parent=1 // pred_check_branch
      %12 = sbr.rel (0) target = $region5
    $region4: #{down_forward.1} parent=1 // pred_region
      _
    $region5: #{down_forward.1} parent=1 // pred_fallthru
      _
    // Predicated region
    $region6: #{down_forward.1} parent=1 // pred_check
      _
    $region7: #{down_forward.1} parent=1 // pred_check_branch
      %14 = sbr.rel (0) target = $region9
    $region8: #{down_forward.1} parent=1 // pred_region
      _
    $region9: #{down_forward.1} parent=1 // pred_fallthru
      _
    // Predicated region
    $region10: #{down_forward.1} parent=1 // pred_check
      _
    $region11: #{down_forward.1} parent=1 // pred_check_branch
      %16 = sbr.rel (0) target = $region13
    $region12: #{down_forward.1} parent=1 // pred_region
      _
    $region13: #{down_forward.1} parent=1 // pred_fallthru
      _
    // Predicated region
    $region14: #{down_forward.1} parent=1 // pred_check
      _
    $region15: #{down_forward.1} parent=1 // pred_check_branch
      %18 = sbr.rel (0) target = $region17
    $region16: #{down_forward.1} parent=1 // pred_region
      %20 = vsyncadd [#allocation3], 0
      %s21 = sshll.u32 %s3, 4
      %s22 = int_to_ptr.hbm [resolvable:$true] %s21
      %s23 = sshll.u32 [#allocation2], 4
      %s24 = int_to_ptr.vmem [resolvable:$true] %s23
      %29 = dma.hbm_to_vmem [thread:$0]  %s22, 24576, %s24, [#allocation3], 256, 256, 16
    $region17: #{down_forward.1} parent=1 // pred_fallthru
      _
    // Predicated region
    $region18: #{down_forward.1} parent=1 // pred_check
      _
    $region19: #{down_forward.1} parent=1 // pred_check_branch
      %31 = sbr.rel (0) target = $region21
    $region20: #{down_forward.1} parent=1 // pred_region
      _
    $region21: #{down_forward.1} parent=1 // pred_fallthru
      _
    // Predicated region
    $region22: #{down_forward.1} parent=1 // pred_check
      _
    $region23: #{down_forward.1} parent=1 // pred_check_branch
      %33 = sbr.rel (0) target = $region25
    $region24: #{down_forward.1} parent=1 // pred_region
      %35 = dma.done [#allocation3], 24576
    $region25: #{down_forward.1} parent=1 // pred_fallthru
      _
    %v36 = vld [vmem:[%s0] sm:$0xff]
    %v37 = vld [vmem:[%s0 + $0x8] sm:$0xff]
    %v38 = vlaneseq
    %v39 = vshrl.u32 %v38, 7
    %v40 = vadd.s32 %v39, 8
    %vm41 = vcmp.lt.s32.totalorder %v39, 0
    %v42 = vsub.s32 0, %v39
    %v43 = vsel %vm41, %v42, %v39
    %v44 = vshrl.u32 %v43, 3
    %v45 = vand.u32 %v43, 7
    %v46 = vsub.s32 0, %v45
    %v47 = vsel %vm41, %v46, %v45
    %vm48 = vcmp.lt.s32.totalorder %v40, 0
    %v49 = vsub.s32 0, %v40
    %v50 = vsel %vm48, %v49, %v40
    %v51 = vshrl.u32 %v50, 3
    %v52 = vand.u32 %v50, 7
    %v53 = vsub.s32 0, %v52
    %v54 = vsel %vm48, %v53, %v52
    %vm55 = vcmp.ne.s32.totalorder %v47, 0
    %vm56 = vcmp.ne.s32.totalorder %v54, 0
    %vm57 = vcmp.lt.s32.totalorder %v47, 0
    %vm58 = vcmp.lt.s32.totalorder %v54, 0
    %vm59 = vmand %vm57, %vm55
    %vm60 = vmand %vm58, %vm56
    %v61 = vadd.s32 %v47, 8
    %v62 = vadd.s32 %v54, 8
    %v63 = vsel %vm59, %v61, %v47
    %v64 = vsel %vm60, %v62, %v54
    %vm65 = vcmp.eq.s32.totalorder %v63, 0
    %vm66 = vcmp.eq.s32.totalorder %v64, 0
    %v67 = vrot.slane %v36, 7
    %v68 = vrot.slane %v37, 7
    %vm69 = vcmp.lt.s32.totalorder %v39, 1
    %v70 = vsel %vm69, %v67, %v68
    %v71 = vsel %vm69, %v68, %v67
    %v72 = vsel %vm65, 0.0, %v71
    %v73 = vsel %vm66, 0.0, %v70
    %vm74 = vcmp.eq.s32.totalorder %v63, 7
    %vm75 = vcmp.eq.s32.totalorder %v64, 7
    %v76 = vrot.slane %v36, 1
    %v77 = vrot.slane %v37, 1
    %vm78 = vcmp.lt.s32.totalorder %v39, 7
    %v79 = vsel %vm78, %v76, %v77
    %v80 = vsel %vm78, %v77, %v76
    %v81 = vsel %vm74, 0.0, %v79
    %v82 = vsel %vm75, 0.0, %v80
    %v83 = vld [vmem:[%s1] sm:$0xff]
    %v84 = vld [vmem:[%s1 + $0x8] sm:$0xff]
    %v85 = vld [vmem:[%s1 + $0x10] sm:$0xff]
    %v86 = vld [vmem:[%s1 + $0x18] sm:$0xff]
    %v87 = vld [vmem:[%s1 + $0x20] sm:$0xff]
    %v88 = vld [vmem:[%s1 + $0x28] sm:$0xff]
    %v89 = vld [vmem:[%s1 + $0x30] sm:$0xff]
    %v90 = vld [vmem:[%s1 + $0x38] sm:$0xff]
    %s91 = scalar_lea.vmem %s1, 64
    %v92 = vld [vmem:[%s91] sm:$0xff]
    %v93 = vld [vmem:[%s91 + $0x8] sm:$0xff]
    %v94 = vld [vmem:[%s91 + $0x10] sm:$0xff]
    %v95 = vld [vmem:[%s91 + $0x18] sm:$0xff]
    %v96 = vld [vmem:[%s91 + $0x20] sm:$0xff]
    %v97 = vld [vmem:[%s91 + $0x28] sm:$0xff]
    %v98 = vld [vmem:[%s91 + $0x30] sm:$0xff]
    %v99 = vld [vmem:[%s91 + $0x38] sm:$0xff]
    %vm100 = vcmask 261120
    %v102 = vsel %vm100, %v36, 0
    %v105 = vsel %vm100, %v37, 0
    %107 = vmatpush.msra.mxu0 0.0
    %108 = vmatpush.msra.mxu0 0.0
    %109 = vmatpush.msra.mxu0 0.0
    %110 = vmatpush.msra.mxu0 0.0
    %111 = vmatpush.msra.mxu0 0.0
    %112 = vmatpush.msra.mxu0 0.0
    %113 = vmatpush.msra.mxu0 0.0
    %114 = vmatpush.msra.mxu0 0.0
    %115 = vmatpush.msra.mxu0 0.0
    %116 = vmatpush.msra.mxu0 0.0
    %117 = vmatpush.msra.mxu0 0.0
    %118 = vmatpush.msra.mxu0 0.0
    %119 = vmatpush.msra.mxu0 %v98
    %120 = vmatpush.msra.mxu0 %v96
    %121 = vmatpush.msra.mxu0 %v94
    %122 = vmatpush.msra.mxu0 %v92
    %123 = vmatmul.f32.gmra.mxu0 %v102
    %v124 = vpop.f32.mrf.mxu0
    %v125 = vadd.f32 0.0, %v124
    %126 = vmatmul.f32.gmra.mxu0 %v105
    %v127 = vpop.f32.mrf.mxu0
    %v128 = vadd.f32 0.0, %v127
    %129 = vdwg.mxu0
    %130 = vmatpush.msra.mxu0 0.0
    %131 = vmatpush.msra.mxu0 0.0
    %132 = vmatpush.msra.mxu0 0.0
    %133 = vmatpush.msra.mxu0 0.0
    %134 = vmatpush.msra.mxu0 0.0
    %135 = vmatpush.msra.mxu0 0.0
    %136 = vmatpush.msra.mxu0 0.0
    %137 = vmatpush.msra.mxu0 0.0
    %138 = vmatpush.msra.mxu0 0.0
    %139 = vmatpush.msra.mxu0 0.0
    %140 = vmatpush.msra.mxu0 0.0
    %141 = vmatpush.msra.mxu0 0.0
    %142 = vmatpush.msra.mxu0 %v99
    %143 = vmatpush.msra.mxu0 %v97
    %144 = vmatpush.msra.mxu0 %v95
    %145 = vmatpush.msra.mxu0 %v93
    %146 = vmatmul.f32.gmra.mxu0 %v102
    %v147 = vpop.f32.mrf.mxu0
    %v148 = vadd.f32 0.0, %v147
    %149 = vmatmul.f32.gmra.mxu0 %v105
    %v150 = vpop.f32.mrf.mxu0
    %v151 = vadd.f32 0.0, %v150
    %152 = vdwg.mxu0
    %v154 = vsel %vm100, %v72, 0
    %v157 = vsel %vm100, %v73, 0
    %159 = vmatpush.msra.mxu0 0.0
    %160 = vmatpush.msra.mxu0 0.0
    %161 = vmatpush.msra.mxu0 0.0
    %162 = vmatpush.msra.mxu0 0.0
    %163 = vmatpush.msra.mxu0 0.0
    %164 = vmatpush.msra.mxu0 0.0
    %165 = vmatpush.msra.mxu0 0.0
    %166 = vmatpush.msra.mxu0 0.0
    %167 = vmatpush.msra.mxu0 0.0
    %168 = vmatpush.msra.mxu0 0.0
    %169 = vmatpush.msra.mxu0 0.0
    %170 = vmatpush.msra.mxu0 0.0
    %171 = vmatpush.msra.mxu0 %v89
    %172 = vmatpush.msra.mxu0 %v87
    %173 = vmatpush.msra.mxu0 %v85
    %174 = vmatpush.msra.mxu0 %v83
    %175 = vmatmul.f32.gmra.mxu0 %v154
    %v176 = vpop.f32.mrf.mxu0
    %v177 = vadd.f32 %v125, %v176
    %178 = vmatmul.f32.gmra.mxu0 %v157
    %v179 = vpop.f32.mrf.mxu0
    %v180 = vadd.f32 %v128, %v179
    %181 = vdwg.mxu0
    %182 = vmatpush.msra.mxu0 0.0
    %183 = vmatpush.msra.mxu0 0.0
    %184 = vmatpush.msra.mxu0 0.0
    %185 = vmatpush.msra.mxu0 0.0
    %186 = vmatpush.msra.mxu0 0.0
    %187 = vmatpush.msra.mxu0 0.0
    %188 = vmatpush.msra.mxu0 0.0
    %189 = vmatpush.msra.mxu0 0.0
    %190 = vmatpush.msra.mxu0 0.0
    %191 = vmatpush.msra.mxu0 0.0
    %192 = vmatpush.msra.mxu0 0.0
    %193 = vmatpush.msra.mxu0 0.0
    %194 = vmatpush.msra.mxu0 %v90
    %195 = vmatpush.msra.mxu0 %v88
    %196 = vmatpush.msra.mxu0 %v86
    %197 = vmatpush.msra.mxu0 %v84
    %198 = vmatmul.f32.gmra.mxu0 %v154
    %v199 = vpop.f32.mrf.mxu0
    %v200 = vadd.f32 %v148, %v199
    %201 = vmatmul.f32.gmra.mxu0 %v157
    %v202 = vpop.f32.mrf.mxu0
    %v203 = vadd.f32 %v151, %v202
    %204 = vdwg.mxu0
    %s205 = scalar_lea.vmem %s1, 128
    %v206 = vld [vmem:[%s205] sm:$0xff]
    %v207 = vld [vmem:[%s205 + $0x8] sm:$0xff]
    %v208 = vld [vmem:[%s205 + $0x10] sm:$0xff]
    %v209 = vld [vmem:[%s205 + $0x18] sm:$0xff]
    %v210 = vld [vmem:[%s205 + $0x20] sm:$0xff]
    %v211 = vld [vmem:[%s205 + $0x28] sm:$0xff]
    %v212 = vld [vmem:[%s205 + $0x30] sm:$0xff]
    %v213 = vld [vmem:[%s205 + $0x38] sm:$0xff]
    %v215 = vsel %vm100, %v81, 0
    %v218 = vsel %vm100, %v82, 0
    %220 = vmatpush.msra.mxu0 0.0
    %221 = vmatpush.msra.mxu0 0.0
    %222 = vmatpush.msra.mxu0 0.0
    %223 = vmatpush.msra.mxu0 0.0
    %224 = vmatpush.msra.mxu0 0.0
    %225 = vmatpush.msra.mxu0 0.0
    %226 = vmatpush.msra.mxu0 0.0
    %227 = vmatpush.msra.mxu0 0.0
    %228 = vmatpush.msra.mxu0 0.0
    %229 = vmatpush.msra.mxu0 0.0
    %230 = vmatpush.msra.mxu0 0.0
    %231 = vmatpush.msra.mxu0 0.0
    %232 = vmatpush.msra.mxu0 %v212
    %233 = vmatpush.msra.mxu0 %v210
    %234 = vmatpush.msra.mxu0 %v208
    %235 = vmatpush.msra.mxu0 %v206
    %236 = vmatmul.f32.gmra.mxu0 %v215
    %v237 = vpop.f32.mrf.mxu0
    %v238 = vadd.f32 0.0, %v237
    %239 = vmatmul.f32.gmra.mxu0 %v218
    %v240 = vpop.f32.mrf.mxu0
    %v241 = vadd.f32 0.0, %v240
    %242 = vdwg.mxu0
    %243 = vmatpush.msra.mxu0 0.0
    %244 = vmatpush.msra.mxu0 0.0
    %245 = vmatpush.msra.mxu0 0.0
    %246 = vmatpush.msra.mxu0 0.0
    %247 = vmatpush.msra.mxu0 0.0
    %248 = vmatpush.msra.mxu0 0.0
    %249 = vmatpush.msra.mxu0 0.0
    %250 = vmatpush.msra.mxu0 0.0
    %251 = vmatpush.msra.mxu0 0.0
    %252 = vmatpush.msra.mxu0 0.0
    %253 = vmatpush.msra.mxu0 0.0
    %254 = vmatpush.msra.mxu0 0.0
    %255 = vmatpush.msra.mxu0 %v213
    %256 = vmatpush.msra.mxu0 %v211
    %257 = vmatpush.msra.mxu0 %v209
    %258 = vmatpush.msra.mxu0 %v207
    %259 = vmatmul.f32.gmra.mxu0 %v215
    %v260 = vpop.f32.mrf.mxu0
    %v261 = vadd.f32 0.0, %v260
    %262 = vmatmul.f32.gmra.mxu0 %v218
    %v263 = vpop.f32.mrf.mxu0
    %v264 = vadd.f32 0.0, %v263
    %265 = vdwg.mxu0
    %v266 = vadd.f32 %v177, %v238
    %v267 = vadd.f32 %v200, %v261
    %v268 = vadd.f32 %v180, %v241
    %v269 = vadd.f32 %v203, %v264
    %v270 = vld [vmem:[%s2] sm:$0x3]
    %v272 = vperm.slane %v270, 0
    %v273 = vperm.slane %v270, 1
    %v276 = vadd.f32 %v266, %v272
    %v277 = vadd.f32 %v267, %v273
    %v278 = vadd.f32 %v268, %v272
    %v279 = vadd.f32 %v269, %v273
    %v280 = vmax.f32 %v276, 0.0
    %v281 = vmax.f32 %v277, 0.0
    %v282 = vmax.f32 %v278, 0.0
    %v283 = vmax.f32 %v279, 0.0
    %v284 = vrot.slane %v280, 7
    %v285 = vrot.slane %v281, 7
    %v286 = vrot.slane %v282, 7
    %v287 = vrot.slane %v283, 7
    %v288 = vsel %vm69, %v284, %v286
    %v289 = vsel %vm69, %v285, %v287
    %v290 = vsel %vm69, %v286, %v284
    %v291 = vsel %vm69, %v287, %v285
    %v292 = vsel %vm65, 0.0, %v290
    %v293 = vsel %vm65, 0.0, %v291
    %v294 = vsel %vm66, 0.0, %v288
    %v295 = vsel %vm66, 0.0, %v289
    %v296 = vrot.slane %v280, 1
    %v297 = vrot.slane %v281, 1
    %v298 = vrot.slane %v282, 1
    %v299 = vrot.slane %v283, 1
    %v300 = vsel %vm78, %v296, %v298
    %v301 = vsel %vm78, %v297, %v299
    %v302 = vsel %vm78, %v298, %v296
    %v303 = vsel %vm78, %v299, %v297
    %v304 = vsel %vm74, 0.0, %v300
    %v305 = vsel %vm74, 0.0, %v301
    %v306 = vsel %vm75, 0.0, %v302
    %v307 = vsel %vm75, 0.0, %v303
    %v308 = vld [vmem:[#allocation2] sm:$0xff]
    %v309 = vld [vmem:[#allocation2 + $0x8] sm:$0xff]
    %v310 = vld [vmem:[#allocation2 + $0x10] sm:$0xff]
    %v311 = vld [vmem:[#allocation2 + $0x18] sm:$0xff]
    %v312 = vld [vmem:[#allocation2 + $0x20] sm:$0xff]
    %v313 = vld [vmem:[#allocation2 + $0x28] sm:$0xff]
    %v314 = vld [vmem:[#allocation2 + $0x30] sm:$0xff]
    %v315 = vld [vmem:[#allocation2 + $0x38] sm:$0xff]
    %v316 = vld [vmem:[#allocation2 + $0x40] sm:$0xff]
    %v317 = vld [vmem:[#allocation2 + $0x48] sm:$0xff]
    %v318 = vld [vmem:[#allocation2 + $0x50] sm:$0xff]
    %v319 = vld [vmem:[#allocation2 + $0x58] sm:$0xff]
    %v320 = vld [vmem:[#allocation2 + $0x60] sm:$0xff]
    %v321 = vld [vmem:[#allocation2 + $0x68] sm:$0xff]
    %v322 = vld [vmem:[#allocation2 + $0x70] sm:$0xff]
    %v323 = vld [vmem:[#allocation2 + $0x78] sm:$0xff]
    %v324 = vld [vmem:[#allocation2 + $0x80] sm:$0xff]
    %v325 = vld [vmem:[#allocation2 + $0x88] sm:$0xff]
    %v326 = vld [vmem:[#allocation2 + $0x90] sm:$0xff]
    %v327 = vld [vmem:[#allocation2 + $0x98] sm:$0xff]
    %v328 = vld [vmem:[#allocation2 + $0xa0] sm:$0xff]
    %v329 = vld [vmem:[#allocation2 + $0xa8] sm:$0xff]
    %v330 = vld [vmem:[#allocation2 + $0xb0] sm:$0xff]
    %v331 = vld [vmem:[#allocation2 + $0xb8] sm:$0xff]
    %v332 = vld [vmem:[#allocation2 + $0xc0] sm:$0xff]
    %v333 = vld [vmem:[#allocation2 + $0xc8] sm:$0xff]
    %v334 = vld [vmem:[#allocation2 + $0xd0] sm:$0xff]
    %v335 = vld [vmem:[#allocation2 + $0xd8] sm:$0xff]
    %v336 = vld [vmem:[#allocation2 + $0xe0] sm:$0xff]
    %v337 = vld [vmem:[#allocation2 + $0xe8] sm:$0xff]
    %v338 = vld [vmem:[#allocation2 + $0xf0] sm:$0xff]
    %v339 = vld [vmem:[#allocation2 + $0xf8] sm:$0xff]
    %v340 = vld [vmem:[#allocation2 + $0x100] sm:$0xff]
    %v341 = vld [vmem:[#allocation2 + $0x108] sm:$0xff]
    %v342 = vld [vmem:[#allocation2 + $0x110] sm:$0xff]
    %v343 = vld [vmem:[#allocation2 + $0x118] sm:$0xff]
    %v344 = vld [vmem:[#allocation2 + $0x120] sm:$0xff]
    %v345 = vld [vmem:[#allocation2 + $0x128] sm:$0xff]
    %v346 = vld [vmem:[#allocation2 + $0x130] sm:$0xff]
    %v347 = vld [vmem:[#allocation2 + $0x138] sm:$0xff]
    %v348 = vld [vmem:[#allocation2 + $0x140] sm:$0xff]
    %v349 = vld [vmem:[#allocation2 + $0x148] sm:$0xff]
    %v350 = vld [vmem:[#allocation2 + $0x150] sm:$0xff]
    %v351 = vld [vmem:[#allocation2 + $0x158] sm:$0xff]
    %v352 = vld [vmem:[#allocation2 + $0x160] sm:$0xff]
    %v353 = vld [vmem:[#allocation2 + $0x168] sm:$0xff]
    %v354 = vld [vmem:[#allocation2 + $0x170] sm:$0xff]
    %v355 = vld [vmem:[#allocation2 + $0x178] sm:$0xff]
    %v356 = vld [vmem:[#allocation2 + $0x180] sm:$0xff]
    %v357 = vld [vmem:[#allocation2 + $0x188] sm:$0xff]
    %v358 = vld [vmem:[#allocation2 + $0x190] sm:$0xff]
    %v359 = vld [vmem:[#allocation2 + $0x198] sm:$0xff]
    %v360 = vld [vmem:[#allocation2 + $0x1a0] sm:$0xff]
    %v361 = vld [vmem:[#allocation2 + $0x1a8] sm:$0xff]
    %v362 = vld [vmem:[#allocation2 + $0x1b0] sm:$0xff]
    %v363 = vld [vmem:[#allocation2 + $0x1b8] sm:$0xff]
    %v364 = vld [vmem:[#allocation2 + $0x1c0] sm:$0xff]
    %v365 = vld [vmem:[#allocation2 + $0x1c8] sm:$0xff]
    %v366 = vld [vmem:[#allocation2 + $0x1d0] sm:$0xff]
    %v367 = vld [vmem:[#allocation2 + $0x1d8] sm:$0xff]
    %v368 = vld [vmem:[#allocation2 + $0x1e0] sm:$0xff]
    %v369 = vld [vmem:[#allocation2 + $0x1e8] sm:$0xff]
    %v370 = vld [vmem:[#allocation2 + $0x1f0] sm:$0xff]
    %v371 = vld [vmem:[#allocation2 + $0x1f8] sm:$0xff]
    %v372 = vld [vmem:[#allocation2 + $0x200] sm:$0xff]
    %v373 = vld [vmem:[#allocation2 + $0x208] sm:$0xff]
    %v374 = vld [vmem:[#allocation2 + $0x210] sm:$0xff]
    %v375 = vld [vmem:[#allocation2 + $0x218] sm:$0xff]
    %v376 = vld [vmem:[#allocation2 + $0x220] sm:$0xff]
    %v377 = vld [vmem:[#allocation2 + $0x228] sm:$0xff]
    %v378 = vld [vmem:[#allocation2 + $0x230] sm:$0xff]
    %v379 = vld [vmem:[#allocation2 + $0x238] sm:$0xff]
    %v380 = vld [vmem:[#allocation2 + $0x240] sm:$0xff]
    %v381 = vld [vmem:[#allocation2 + $0x248] sm:$0xff]
    %v382 = vld [vmem:[#allocation2 + $0x250] sm:$0xff]
    %v383 = vld [vmem:[#allocation2 + $0x258] sm:$0xff]
    %v384 = vld [vmem:[#allocation2 + $0x260] sm:$0xff]
    %v385 = vld [vmem:[#allocation2 + $0x268] sm:$0xff]
    %v386 = vld [vmem:[#allocation2 + $0x270] sm:$0xff]
    %v387 = vld [vmem:[#allocation2 + $0x278] sm:$0xff]
    %v388 = vld [vmem:[#allocation2 + $0x280] sm:$0xff]
    %v389 = vld [vmem:[#allocation2 + $0x288] sm:$0xff]
    %v390 = vld [vmem:[#allocation2 + $0x290] sm:$0xff]
    %v391 = vld [vmem:[#allocation2 + $0x298] sm:$0xff]
    %v392 = vld [vmem:[#allocation2 + $0x2a0] sm:$0xff]
    %v393 = vld [vmem:[#allocation2 + $0x2a8] sm:$0xff]
    %v394 = vld [vmem:[#allocation2 + $0x2b0] sm:$0xff]
    %v395 = vld [vmem:[#allocation2 + $0x2b8] sm:$0xff]
    %v396 = vld [vmem:[#allocation2 + $0x2c0] sm:$0xff]
    %v397 = vld [vmem:[#allocation2 + $0x2c8] sm:$0xff]
    %v398 = vld [vmem:[#allocation2 + $0x2d0] sm:$0xff]
    %v399 = vld [vmem:[#allocation2 + $0x2d8] sm:$0xff]
    %v400 = vld [vmem:[#allocation2 + $0x2e0] sm:$0xff]
    %v401 = vld [vmem:[#allocation2 + $0x2e8] sm:$0xff]
    %v402 = vld [vmem:[#allocation2 + $0x2f0] sm:$0xff]
    %v403 = vld [vmem:[#allocation2 + $0x2f8] sm:$0xff]
    %v404 = vld [vmem:[#allocation2 + $0x300] sm:$0xff]
    %v405 = vld [vmem:[#allocation2 + $0x308] sm:$0xff]
    %v406 = vld [vmem:[#allocation2 + $0x310] sm:$0xff]
    %v407 = vld [vmem:[#allocation2 + $0x318] sm:$0xff]
    %v408 = vld [vmem:[#allocation2 + $0x320] sm:$0xff]
    %v409 = vld [vmem:[#allocation2 + $0x328] sm:$0xff]
    %v410 = vld [vmem:[#allocation2 + $0x330] sm:$0xff]
    %v411 = vld [vmem:[#allocation2 + $0x338] sm:$0xff]
    %v412 = vld [vmem:[#allocation2 + $0x340] sm:$0xff]
    %v413 = vld [vmem:[#allocation2 + $0x348] sm:$0xff]
    %v414 = vld [vmem:[#allocation2 + $0x350] sm:$0xff]
    %v415 = vld [vmem:[#allocation2 + $0x358] sm:$0xff]
    %v416 = vld [vmem:[#allocation2 + $0x360] sm:$0xff]
    %v417 = vld [vmem:[#allocation2 + $0x368] sm:$0xff]
    %v418 = vld [vmem:[#allocation2 + $0x370] sm:$0xff]
    %v419 = vld [vmem:[#allocation2 + $0x378] sm:$0xff]
    %v420 = vld [vmem:[#allocation2 + $0x380] sm:$0xff]
    %v421 = vld [vmem:[#allocation2 + $0x388] sm:$0xff]
    %v422 = vld [vmem:[#allocation2 + $0x390] sm:$0xff]
    %v423 = vld [vmem:[#allocation2 + $0x398] sm:$0xff]
    %v424 = vld [vmem:[#allocation2 + $0x3a0] sm:$0xff]
    %v425 = vld [vmem:[#allocation2 + $0x3a8] sm:$0xff]
    %v426 = vld [vmem:[#allocation2 + $0x3b0] sm:$0xff]
    %v427 = vld [vmem:[#allocation2 + $0x3b8] sm:$0xff]
    %v428 = vld [vmem:[#allocation2 + $0x3c0] sm:$0xff]
    %v429 = vld [vmem:[#allocation2 + $0x3c8] sm:$0xff]
    %v430 = vld [vmem:[#allocation2 + $0x3d0] sm:$0xff]
    %v431 = vld [vmem:[#allocation2 + $0x3d8] sm:$0xff]
    %v432 = vld [vmem:[#allocation2 + $0x3e0] sm:$0xff]
    %v433 = vld [vmem:[#allocation2 + $0x3e8] sm:$0xff]
    %v434 = vld [vmem:[#allocation2 + $0x3f0] sm:$0xff]
    %v435 = vld [vmem:[#allocation2 + $0x3f8] sm:$0xff]
    %v436 = vld [vmem:[#allocation2 + $0x400] sm:$0xff]
    %v437 = vld [vmem:[#allocation2 + $0x408] sm:$0xff]
    %v438 = vld [vmem:[#allocation2 + $0x410] sm:$0xff]
    %v439 = vld [vmem:[#allocation2 + $0x418] sm:$0xff]
    %v440 = vld [vmem:[#allocation2 + $0x420] sm:$0xff]
    %v441 = vld [vmem:[#allocation2 + $0x428] sm:$0xff]
    %v442 = vld [vmem:[#allocation2 + $0x430] sm:$0xff]
    %v443 = vld [vmem:[#allocation2 + $0x438] sm:$0xff]
    %v444 = vld [vmem:[#allocation2 + $0x440] sm:$0xff]
    %v445 = vld [vmem:[#allocation2 + $0x448] sm:$0xff]
    %v446 = vld [vmem:[#allocation2 + $0x450] sm:$0xff]
    %v447 = vld [vmem:[#allocation2 + $0x458] sm:$0xff]
    %v448 = vld [vmem:[#allocation2 + $0x460] sm:$0xff]
    %v449 = vld [vmem:[#allocation2 + $0x468] sm:$0xff]
    %v450 = vld [vmem:[#allocation2 + $0x470] sm:$0xff]
    %v451 = vld [vmem:[#allocation2 + $0x478] sm:$0xff]
    %v452 = vld [vmem:[#allocation2 + $0x480] sm:$0xff]
    %v453 = vld [vmem:[#allocation2 + $0x488] sm:$0xff]
    %v454 = vld [vmem:[#allocation2 + $0x490] sm:$0xff]
    %v455 = vld [vmem:[#allocation2 + $0x498] sm:$0xff]
    %v456 = vld [vmem:[#allocation2 + $0x4a0] sm:$0xff]
    %v457 = vld [vmem:[#allocation2 + $0x4a8] sm:$0xff]
    %v458 = vld [vmem:[#allocation2 + $0x4b0] sm:$0xff]
    %v459 = vld [vmem:[#allocation2 + $0x4b8] sm:$0xff]
    %v460 = vld [vmem:[#allocation2 + $0x4c0] sm:$0xff]
    %v461 = vld [vmem:[#allocation2 + $0x4c8] sm:$0xff]
    %v462 = vld [vmem:[#allocation2 + $0x4d0] sm:$0xff]
    %v463 = vld [vmem:[#allocation2 + $0x4d8] sm:$0xff]
    %v464 = vld [vmem:[#allocation2 + $0x4e0] sm:$0xff]
    %v465 = vld [vmem:[#allocation2 + $0x4e8] sm:$0xff]
    %v466 = vld [vmem:[#allocation2 + $0x4f0] sm:$0xff]
    %v467 = vld [vmem:[#allocation2 + $0x4f8] sm:$0xff]
    %v468 = vld [vmem:[#allocation2 + $0x500] sm:$0xff]
    %v469 = vld [vmem:[#allocation2 + $0x508] sm:$0xff]
    %v470 = vld [vmem:[#allocation2 + $0x510] sm:$0xff]
    %v471 = vld [vmem:[#allocation2 + $0x518] sm:$0xff]
    %v472 = vld [vmem:[#allocation2 + $0x520] sm:$0xff]
    %v473 = vld [vmem:[#allocation2 + $0x528] sm:$0xff]
    %v474 = vld [vmem:[#allocation2 + $0x530] sm:$0xff]
    %v475 = vld [vmem:[#allocation2 + $0x538] sm:$0xff]
    %v476 = vld [vmem:[#allocation2 + $0x540] sm:$0xff]
    %v477 = vld [vmem:[#allocation2 + $0x548] sm:$0xff]
    %v478 = vld [vmem:[#allocation2 + $0x550] sm:$0xff]
    %v479 = vld [vmem:[#allocation2 + $0x558] sm:$0xff]
    %v480 = vld [vmem:[#allocation2 + $0x560] sm:$0xff]
    %v481 = vld [vmem:[#allocation2 + $0x568] sm:$0xff]
    %v482 = vld [vmem:[#allocation2 + $0x570] sm:$0xff]
    %v483 = vld [vmem:[#allocation2 + $0x578] sm:$0xff]
    %v484 = vld [vmem:[#allocation2 + $0x580] sm:$0xff]
    %v485 = vld [vmem:[#allocation2 + $0x588] sm:$0xff]
    %v486 = vld [vmem:[#allocation2 + $0x590] sm:$0xff]
    %v487 = vld [vmem:[#allocation2 + $0x598] sm:$0xff]
    %v488 = vld [vmem:[#allocation2 + $0x5a0] sm:$0xff]
    %v489 = vld [vmem:[#allocation2 + $0x5a8] sm:$0xff]
    %v490 = vld [vmem:[#allocation2 + $0x5b0] sm:$0xff]
    %v491 = vld [vmem:[#allocation2 + $0x5b8] sm:$0xff]
    %v492 = vld [vmem:[#allocation2 + $0x5c0] sm:$0xff]
    %v493 = vld [vmem:[#allocation2 + $0x5c8] sm:$0xff]
    %v494 = vld [vmem:[#allocation2 + $0x5d0] sm:$0xff]
    %v495 = vld [vmem:[#allocation2 + $0x5d8] sm:$0xff]
    %v496 = vld [vmem:[#allocation2 + $0x5e0] sm:$0xff]
    %v497 = vld [vmem:[#allocation2 + $0x5e8] sm:$0xff]
    %v498 = vld [vmem:[#allocation2 + $0x5f0] sm:$0xff]
    %v499 = vld [vmem:[#allocation2 + $0x5f8] sm:$0xff]
    %v500 = vld [vmem:[%s4] sm:$0x3]
    %v502 = vperm.slane %v500, 0
    %v503 = vperm.slane %v500, 1
    %506 = vmatpush.msra.mxu0 %v338
    %507 = vmatpush.msra.mxu0 %v336
    %508 = vmatpush.msra.mxu0 %v334
    %509 = vmatpush.msra.mxu0 %v332
    %510 = vmatpush.msra.mxu0 %v330
    %511 = vmatpush.msra.mxu0 %v328
    %512 = vmatpush.msra.mxu0 %v326
    %513 = vmatpush.msra.mxu0 %v324
    %514 = vmatpush.msra.mxu0 %v322
    %515 = vmatpush.msra.mxu0 %v320
    %516 = vmatpush.msra.mxu0 %v318
    %517 = vmatpush.msra.mxu0 %v316
    %518 = vmatpush.msra.mxu0 %v314
    %519 = vmatpush.msra.mxu0 %v312
    %520 = vmatpush.msra.mxu0 %v310
    %521 = vmatpush.msra.mxu0 %v308
    %522 = vmatmul.f32.gmra.mxu0 %v292
    %v523 = vpop.f32.mrf.mxu0
    %v524 = vadd.f32 %v502, %v523
    %525 = vmatmul.f32.gmra.mxu0 %v294
    %v526 = vpop.f32.mrf.mxu0
    %v527 = vadd.f32 %v502, %v526
    %528 = vdwg.mxu0
    %529 = vmatpush.msra.mxu0 %v370
    %530 = vmatpush.msra.mxu0 %v368
    %531 = vmatpush.msra.mxu0 %v366
    %532 = vmatpush.msra.mxu0 %v364
    %533 = vmatpush.msra.mxu0 %v362
    %534 = vmatpush.msra.mxu0 %v360
    %535 = vmatpush.msra.mxu0 %v358
    %536 = vmatpush.msra.mxu0 %v356
    %537 = vmatpush.msra.mxu0 %v354
    %538 = vmatpush.msra.mxu0 %v352
    %539 = vmatpush.msra.mxu0 %v350
    %540 = vmatpush.msra.mxu0 %v348
    %541 = vmatpush.msra.mxu0 %v346
    %542 = vmatpush.msra.mxu0 %v344
    %543 = vmatpush.msra.mxu0 %v342
    %544 = vmatpush.msra.mxu0 %v340
    %545 = vmatmul.f32.gmra.mxu0 %v293
    %v546 = vpop.f32.mrf.mxu0
    %v547 = vadd.f32 %v524, %v546
    %548 = vmatmul.f32.gmra.mxu0 %v295
    %v549 = vpop.f32.mrf.mxu0
    %v550 = vadd.f32 %v527, %v549
    %551 = vdwg.mxu0
    %552 = vmatpush.msra.mxu0 %v402
    %553 = vmatpush.msra.mxu0 %v400
    %554 = vmatpush.msra.mxu0 %v398
    %555 = vmatpush.msra.mxu0 %v396
    %556 = vmatpush.msra.mxu0 %v394
    %557 = vmatpush.msra.mxu0 %v392
    %558 = vmatpush.msra.mxu0 %v390
    %559 = vmatpush.msra.mxu0 %v388
    %560 = vmatpush.msra.mxu0 %v386
    %561 = vmatpush.msra.mxu0 %v384
    %562 = vmatpush.msra.mxu0 %v382
    %563 = vmatpush.msra.mxu0 %v380
    %564 = vmatpush.msra.mxu0 %v378
    %565 = vmatpush.msra.mxu0 %v376
    %566 = vmatpush.msra.mxu0 %v374
    %567 = vmatpush.msra.mxu0 %v372
    %568 = vmatmul.f32.gmra.mxu0 %v280
    %v569 = vpop.f32.mrf.mxu0
    %v570 = vadd.f32 %v547, %v569
    %571 = vmatmul.f32.gmra.mxu0 %v282
    %v572 = vpop.f32.mrf.mxu0
    %v573 = vadd.f32 %v550, %v572
    %574 = vdwg.mxu0
    %575 = vmatpush.msra.mxu0 %v434
    %576 = vmatpush.msra.mxu0 %v432
    %577 = vmatpush.msra.mxu0 %v430
    %578 = vmatpush.msra.mxu0 %v428
    %579 = vmatpush.msra.mxu0 %v426
    %580 = vmatpush.msra.mxu0 %v424
    %581 = vmatpush.msra.mxu0 %v422
    %582 = vmatpush.msra.mxu0 %v420
    %583 = vmatpush.msra.mxu0 %v418
    %584 = vmatpush.msra.mxu0 %v416
    %585 = vmatpush.msra.mxu0 %v414
    %586 = vmatpush.msra.mxu0 %v412
    %587 = vmatpush.msra.mxu0 %v410
    %588 = vmatpush.msra.mxu0 %v408
    %589 = vmatpush.msra.mxu0 %v406
    %590 = vmatpush.msra.mxu0 %v404
    %591 = vmatmul.f32.gmra.mxu0 %v281
    %v592 = vpop.f32.mrf.mxu0
    %v593 = vadd.f32 %v570, %v592
    %594 = vmatmul.f32.gmra.mxu0 %v283
    %v595 = vpop.f32.mrf.mxu0
    %v596 = vadd.f32 %v573, %v595
    %597 = vdwg.mxu0
    %598 = vmatpush.msra.mxu0 %v466
    %599 = vmatpush.msra.mxu0 %v464
    %600 = vmatpush.msra.mxu0 %v462
    %601 = vmatpush.msra.mxu0 %v460
    %602 = vmatpush.msra.mxu0 %v458
    %603 = vmatpush.msra.mxu0 %v456
    %604 = vmatpush.msra.mxu0 %v454
    %605 = vmatpush.msra.mxu0 %v452
    %606 = vmatpush.msra.mxu0 %v450
    %607 = vmatpush.msra.mxu0 %v448
    %608 = vmatpush.msra.mxu0 %v446
    %609 = vmatpush.msra.mxu0 %v444
    %610 = vmatpush.msra.mxu0 %v442
    %611 = vmatpush.msra.mxu0 %v440
    %612 = vmatpush.msra.mxu0 %v438
    %613 = vmatpush.msra.mxu0 %v436
    %614 = vmatmul.f32.gmra.mxu0 %v304
    %v615 = vpop.f32.mrf.mxu0
    %v616 = vadd.f32 %v593, %v615
    %617 = vmatmul.f32.gmra.mxu0 %v306
    %v618 = vpop.f32.mrf.mxu0
    %v619 = vadd.f32 %v596, %v618
    %620 = vdwg.mxu0
    %621 = vmatpush.msra.mxu0 %v498
    %622 = vmatpush.msra.mxu0 %v496
    %623 = vmatpush.msra.mxu0 %v494
    %624 = vmatpush.msra.mxu0 %v492
    %625 = vmatpush.msra.mxu0 %v490
    %626 = vmatpush.msra.mxu0 %v488
    %627 = vmatpush.msra.mxu0 %v486
    %628 = vmatpush.msra.mxu0 %v484
    %629 = vmatpush.msra.mxu0 %v482
    %630 = vmatpush.msra.mxu0 %v480
    %631 = vmatpush.msra.mxu0 %v478
    %632 = vmatpush.msra.mxu0 %v476
    %633 = vmatpush.msra.mxu0 %v474
    %634 = vmatpush.msra.mxu0 %v472
    %635 = vmatpush.msra.mxu0 %v470
    %636 = vmatpush.msra.mxu0 %v468
    %637 = vmatmul.f32.gmra.mxu0 %v305
    %v638 = vpop.f32.mrf.mxu0
    %v639 = vadd.f32 %v616, %v638
    %640 = vmatmul.f32.gmra.mxu0 %v307
    %v641 = vpop.f32.mrf.mxu0
    %v642 = vadd.f32 %v619, %v641
    %643 = vdwg.mxu0
    %644 = vmatpush.msra.mxu0 %v339
    %645 = vmatpush.msra.mxu0 %v337
    %646 = vmatpush.msra.mxu0 %v335
    %647 = vmatpush.msra.mxu0 %v333
    %648 = vmatpush.msra.mxu0 %v331
    %649 = vmatpush.msra.mxu0 %v329
    %650 = vmatpush.msra.mxu0 %v327
    %651 = vmatpush.msra.mxu0 %v325
    %652 = vmatpush.msra.mxu0 %v323
    %653 = vmatpush.msra.mxu0 %v321
    %654 = vmatpush.msra.mxu0 %v319
    %655 = vmatpush.msra.mxu0 %v317
    %656 = vmatpush.msra.mxu0 %v315
    %657 = vmatpush.msra.mxu0 %v313
    %658 = vmatpush.msra.mxu0 %v311
    %659 = vmatpush.msra.mxu0 %v309
    %660 = vmatmul.f32.gmra.mxu0 %v292
    %v661 = vpop.f32.mrf.mxu0
    %v662 = vadd.f32 %v503, %v661
    %663 = vmatmul.f32.gmra.mxu0 %v294
    %v664 = vpop.f32.mrf.mxu0
    %v665 = vadd.f32 %v503, %v664
    %666 = vdwg.mxu0
    %667 = vmatpush.msra.mxu0 %v371
    %668 = vmatpush.msra.mxu0 %v369
    %669 = vmatpush.msra.mxu0 %v367
    %670 = vmatpush.msra.mxu0 %v365
    %671 = vmatpush.msra.mxu0 %v363
    %672 = vmatpush.msra.mxu0 %v361
    %673 = vmatpush.msra.mxu0 %v359
    %674 = vmatpush.msra.mxu0 %v357
    %675 = vmatpush.msra.mxu0 %v355
    %676 = vmatpush.msra.mxu0 %v353
    %677 = vmatpush.msra.mxu0 %v351
    %678 = vmatpush.msra.mxu0 %v349
    %679 = vmatpush.msra.mxu0 %v347
    %680 = vmatpush.msra.mxu0 %v345
    %681 = vmatpush.msra.mxu0 %v343
    %682 = vmatpush.msra.mxu0 %v341
    %683 = vmatmul.f32.gmra.mxu0 %v293
    %v684 = vpop.f32.mrf.mxu0
    %v685 = vadd.f32 %v662, %v684
    %686 = vmatmul.f32.gmra.mxu0 %v295
    %v687 = vpop.f32.mrf.mxu0
    %v688 = vadd.f32 %v665, %v687
    %689 = vdwg.mxu0
    %690 = vmatpush.msra.mxu0 %v403
    %691 = vmatpush.msra.mxu0 %v401
    %692 = vmatpush.msra.mxu0 %v399
    %693 = vmatpush.msra.mxu0 %v397
    %694 = vmatpush.msra.mxu0 %v395
    %695 = vmatpush.msra.mxu0 %v393
    %696 = vmatpush.msra.mxu0 %v391
    %697 = vmatpush.msra.mxu0 %v389
    %698 = vmatpush.msra.mxu0 %v387
    %699 = vmatpush.msra.mxu0 %v385
    %700 = vmatpush.msra.mxu0 %v383
    %701 = vmatpush.msra.mxu0 %v381
    %702 = vmatpush.msra.mxu0 %v379
    %703 = vmatpush.msra.mxu0 %v377
    %704 = vmatpush.msra.mxu0 %v375
    %705 = vmatpush.msra.mxu0 %v373
    %706 = vmatmul.f32.gmra.mxu0 %v280
    %v707 = vpop.f32.mrf.mxu0
    %v708 = vadd.f32 %v685, %v707
    %709 = vmatmul.f32.gmra.mxu0 %v282
    %v710 = vpop.f32.mrf.mxu0
    %v711 = vadd.f32 %v688, %v710
    %712 = vdwg.mxu0
    %713 = vmatpush.msra.mxu0 %v435
    %714 = vmatpush.msra.mxu0 %v433
    %715 = vmatpush.msra.mxu0 %v431
    %716 = vmatpush.msra.mxu0 %v429
    %717 = vmatpush.msra.mxu0 %v427
    %718 = vmatpush.msra.mxu0 %v425
    %719 = vmatpush.msra.mxu0 %v423
    %720 = vmatpush.msra.mxu0 %v421
    %721 = vmatpush.msra.mxu0 %v419
    %722 = vmatpush.msra.mxu0 %v417
    %723 = vmatpush.msra.mxu0 %v415
    %724 = vmatpush.msra.mxu0 %v413
    %725 = vmatpush.msra.mxu0 %v411
    %726 = vmatpush.msra.mxu0 %v409
    %727 = vmatpush.msra.mxu0 %v407
    %728 = vmatpush.msra.mxu0 %v405
    %729 = vmatmul.f32.gmra.mxu0 %v281
    %v730 = vpop.f32.mrf.mxu0
    %v731 = vadd.f32 %v708, %v730
    %732 = vmatmul.f32.gmra.mxu0 %v283
    %v733 = vpop.f32.mrf.mxu0
    %v734 = vadd.f32 %v711, %v733
    %735 = vdwg.mxu0
    %736 = vmatpush.msra.mxu0 %v467
    %737 = vmatpush.msra.mxu0 %v465
    %738 = vmatpush.msra.mxu0 %v463
    %739 = vmatpush.msra.mxu0 %v461
    %740 = vmatpush.msra.mxu0 %v459
    %741 = vmatpush.msra.mxu0 %v457
    %742 = vmatpush.msra.mxu0 %v455
    %743 = vmatpush.msra.mxu0 %v453
    %744 = vmatpush.msra.mxu0 %v451
    %745 = vmatpush.msra.mxu0 %v449
    %746 = vmatpush.msra.mxu0 %v447
    %747 = vmatpush.msra.mxu0 %v445
    %748 = vmatpush.msra.mxu0 %v443
    %749 = vmatpush.msra.mxu0 %v441
    %750 = vmatpush.msra.mxu0 %v439
    %751 = vmatpush.msra.mxu0 %v437
    %752 = vmatmul.f32.gmra.mxu0 %v304
    %v753 = vpop.f32.mrf.mxu0
    %v754 = vadd.f32 %v731, %v753
    %755 = vmatmul.f32.gmra.mxu0 %v306
    %v756 = vpop.f32.mrf.mxu0
    %v757 = vadd.f32 %v734, %v756
    %758 = vdwg.mxu0
    %759 = vmatpush.msra.mxu0 %v499
    %760 = vmatpush.msra.mxu0 %v497
    %761 = vmatpush.msra.mxu0 %v495
    %762 = vmatpush.msra.mxu0 %v493
    %763 = vmatpush.msra.mxu0 %v491
    %764 = vmatpush.msra.mxu0 %v489
    %765 = vmatpush.msra.mxu0 %v487
    %766 = vmatpush.msra.mxu0 %v485
    %767 = vmatpush.msra.mxu0 %v483
    %768 = vmatpush.msra.mxu0 %v481
    %769 = vmatpush.msra.mxu0 %v479
    %770 = vmatpush.msra.mxu0 %v477
    %771 = vmatpush.msra.mxu0 %v475
    %772 = vmatpush.msra.mxu0 %v473
    %773 = vmatpush.msra.mxu0 %v471
    %774 = vmatpush.msra.mxu0 %v469
    %775 = vmatmul.f32.gmra.mxu0 %v305
    %v776 = vpop.f32.mrf.mxu0
    %v777 = vadd.f32 %v754, %v776
    %778 = vmatmul.f32.gmra.mxu0 %v307
    %v779 = vpop.f32.mrf.mxu0
    %v780 = vadd.f32 %v757, %v779
    %781 = vdwg.mxu0
    %v782 = vmax.f32 %v639, 0.0
    %v783 = vmax.f32 %v777, 0.0
    %v784 = vmax.f32 %v642, 0.0
    %v785 = vmax.f32 %v780, 0.0
    %786 = vst [vmem:[%s5] sm:$0xff] %v782
    %787 = vst [vmem:[%s5 + $0x8] sm:$0xff] %v783
    %788 = vst [vmem:[%s5 + $0x10] sm:$0xff] %v784
    %789 = vst [vmem:[%s5 + $0x18] sm:$0xff] %v785
    // Predicated region
    $region26: #{down_forward.1} parent=1 // pred_check
      _
    $region27: #{down_forward.1} parent=1 // pred_check_branch
      %791 = sbr.rel (0) target = $region29
    $region28: #{down_forward.1} parent=1 // pred_region
      _
    $region29: #{down_forward.1} parent=1 // pred_fallthru
      _
    // Predicated region
    $region30: #{down_forward.1} parent=1 // pred_check
      _
    $region31: #{down_forward.1} parent=1 // pred_check_branch
      %793 = sbr.rel (0) target = $region33
    $region32: #{down_forward.1} parent=1 // pred_region
      _
    $region33: #{down_forward.1} parent=1 // pred_fallthru
      _
    %794 = vsyncpa [#allocation3], 1

</llo_original>
